<compile_context>
chip_gen: v7x
topology: tpu7x:2x2x1
jax: 0.10.0
libtpu: 0.0.40
codegen_flags: <defaults>
</compile_context>

<pallas_src>
import jax
import jax.numpy as jnp
from jax.experimental import pallas as pl
from jax.experimental.pallas import tpu as pltpu


def _round_up(x, m):
    return ((x + m - 1) // m) * m


def add_conv1x1_kernel(w_ref, a_ref, b_ref, o_ref):
    # w_ref: (Cout, Cin)  full weight, VMEM-resident for the whole grid
    # a_ref, b_ref: (Cin, tm)  pixel tile (channels on sublanes, pixels on lanes)
    # o_ref: (Cout, tm)  lane-dense output tile
    s = a_ref[...] + b_ref[...]
    o_ref[...] = jnp.dot(
        w_ref[...], s, preferred_element_type=jnp.float32
    ).astype(o_ref.dtype)


def add_conv1x1(x53, x41, weight, *, tm=2048):
    """x53, x41: (N, Cin, H, W) float32; weight: (Cout, Cin, 1, 1) float32."""
    N, Cin, H, W = x53.shape
    Cout = weight.shape[0]
    M = H * W

    # NCHW -> (N, Cin, H*W): collapsing trailing dims is layout-preserving (no
    # HBM transpose pass). Same for the weight reshape.
    a = x53.reshape(N, Cin, M)
    b = x41.reshape(N, Cin, M)
    w = weight.reshape(Cout, Cin)

    # Pixel tile: large (HBM-bound kernel, ~0.35us per grid step overhead),
    # multiple of 128 for lane-dense stores, clamped so it never exceeds the
    # (rounded-up) pixel count. Ragged last block is handled by pl.cdiv —
    # out-of-bounds columns are masked on store and cannot contaminate
    # in-bounds columns (the matmul contracts over channels only).
    tm = min(tm, _round_up(M, 128))
    grid_m = pl.cdiv(M, tm)

    out = pl.pallas_call(
        add_conv1x1_kernel,
        out_shape=jax.ShapeDtypeStruct((N, Cout, M), x53.dtype),
        grid_spec=pltpu.PrefetchScalarGridSpec(
            num_scalar_prefetch=0,
            grid=(N, grid_m),
            in_specs=[
                # Full weight block, constant index_map -> stays in VMEM.
                pl.BlockSpec((Cout, Cin), lambda n, i: (0, 0)),
                pl.BlockSpec((None, Cin, tm), lambda n, i: (n, 0, i)),
                pl.BlockSpec((None, Cin, tm), lambda n, i: (n, 0, i)),
            ],
            out_specs=pl.BlockSpec((None, Cout, tm), lambda n, i: (n, 0, i)),
        ),
        compiler_params=pltpu.CompilerParams(
            dimension_semantics=("parallel", "parallel"),
        ),
    )(w, a, b)

    # (N, Cout, H*W) -> (N, Cout, H, W): free reshape, already NCHW.
    return out.reshape(N, Cout, H, W)


if __name__ == "__main__":
    key = jax.random.PRNGKey(0)
    k1, k2, k3 = jax.random.split(key, 3)

    # Shapes consistent with the module: Cin=32, Cout=192 fixed by the conv;
    # spatial reduced from 112 -> 16 for a fast test.
    N, Cin, H, W = 1, 32, 16, 16
    Cout = 192

    x53 = jax.random.normal(k1, (N, Cin, H, W), dtype=jnp.float32)
    x41 = jax.random.normal(k2, (N, Cin, H, W), dtype=jnp.float32)
    weight = jax.random.normal(k3, (Cout, Cin, 1, 1), dtype=jnp.float32) * (
        1.0 / jnp.sqrt(Cin)
    )

    out = add_conv1x1(x53, x41, weight)
    out = jax.block_until_ready(out)

    # Reference check in plain JAX (same math).
    ref = jax.lax.conv_general_dilated(
        x53 + x41,
        weight,
        window_strides=(1, 1),
        padding="VALID",
        dimension_numbers=("NCHW", "OIHW", "NCHW"),
    )
    assert out.shape == (N, Cout, H, W)
    assert jnp.allclose(out, ref, atol=1e-4, rtol=1e-4)

    print("KERNEL_OK")
</pallas_src>

<mosaic_0001>
module attributes {stable_mosaic.version = 11 : i64} {
  func.func @add_conv1x1_kernel(%arg0: i32, %arg1: i32, %arg2: memref<192x32xf32, #tpu.memory_space<vmem>>, %arg3: memref<1x32x256xf32, #tpu.memory_space<vmem>>, %arg4: memref<1x32x256xf32, #tpu.memory_space<vmem>>, %arg5: memref<1x192x256xf32, #tpu.memory_space<vmem>>) attributes {dimension_semantics = [#tpu.dimension_semantics<parallel>, #tpu.dimension_semantics<parallel>], iteration_bounds = array<i64: 1, 1>, scalar_prefetch = 0 : i64, scratch_operands = 0 : i64, tpu.core_type = #tpu.core_type<tc>, window_params = [{pipeline_mode = #tpu.pipeline_mode<synchronous>, transform_indices = @transform_0, window_bounds = array<i64: 192, 32>}, {transform_indices = @transform_1, window_bounds = array<i64: 1, 32, 256>}, {transform_indices = @transform_2, window_bounds = array<i64: 1, 32, 256>}, {transform_indices = @transform_3, window_bounds = array<i64: 1, 192, 256>}]} {
    %c0 = arith.constant 0 : index
    %c0_0 = arith.constant 0 : index
    %c0_1 = arith.constant 0 : index
    %0 = vector.load %arg3[%c0, %c0_0, %c0_1] : memref<1x32x256xf32, #tpu.memory_space<vmem>>, vector<1x32x256xf32>
    %1 = vector.shape_cast %0 : vector<1x32x256xf32> to vector<32x256xf32>
    %c0_2 = arith.constant 0 : index
    %c0_3 = arith.constant 0 : index
    %c0_4 = arith.constant 0 : index
    %2 = vector.load %arg4[%c0_2, %c0_3, %c0_4] : memref<1x32x256xf32, #tpu.memory_space<vmem>>, vector<1x32x256xf32>
    %3 = vector.shape_cast %2 : vector<1x32x256xf32> to vector<32x256xf32>
    %4 = arith.addf %1, %3 : vector<32x256xf32>
    %c0_5 = arith.constant 0 : index
    %c0_6 = arith.constant 0 : index
    %5 = vector.load %arg2[%c0_5, %c0_6] : memref<192x32xf32, #tpu.memory_space<vmem>>, vector<192x32xf32>
    %cst = arith.constant dense<0.000000e+00> : vector<192x256xf32>
    %6 = tpu.matmul %5, %4, %cst {dimension_numbers = #tpu.dot_dimension_numbers<[1], [0], [0], [1], [0, 0, 1, 1], [], []>} : vector<192x32xf32>, vector<32x256xf32>, vector<192x256xf32> -> vector<192x256xf32>
    %c0_7 = arith.constant 0 : index
    %c0_8 = arith.constant 0 : index
    %c0_9 = arith.constant 0 : index
    %7 = vector.load %arg5[%c0_7, %c0_8, %c0_9] : memref<1x192x256xf32, #tpu.memory_space<vmem>>, vector<1x192x256xf32>
    %8 = vector.shape_cast %7 : vector<1x192x256xf32> to vector<192x256xf32>
    %9 = vector.shape_cast %6 : vector<192x256xf32> to vector<1x192x256xf32>
    tpu.vector_store %arg5[%c0_7, %c0_8, %c0_9], %9 {strides = array<i32>} : memref<1x192x256xf32, #tpu.memory_space<vmem>>, vector<1x192x256xf32>,
    return
  }
  func.func @transform_0(%arg0: i32, %arg1: i32) -> (i32, i32) {
    %c0_i32 = arith.constant 0 : i32
    %c0_i32_0 = arith.constant 0 : i32
    %c0_i32_1 = arith.constant 0 : i32
    return %c0_i32, %c0_i32_0 : i32, i32
  }
  func.func @transform_1(%arg0: i32, %arg1: i32) -> (i32, i32, i32) {
    %c0_i32 = arith.constant 0 : i32
    %c0_i32_0 = arith.constant 0 : i32
    return %arg0, %c0_i32, %arg1 : i32, i32, i32
  }
  func.func @transform_2(%arg0: i32, %arg1: i32) -> (i32, i32, i32) {
    %c0_i32 = arith.constant 0 : i32
    %c0_i32_0 = arith.constant 0 : i32
    return %arg0, %c0_i32, %arg1 : i32, i32, i32
  }
  func.func @transform_3(%arg0: i32, %arg1: i32) -> (i32, i32, i32) {
    %c0_i32 = arith.constant 0 : i32
    %c0_i32_0 = arith.constant 0 : i32
    return %arg0, %c0_i32, %arg1 : i32, i32, i32
  }
}

</mosaic_0001>

<llo_original>
// kernel: tpu_custom_call.1
$region0: #{tpu_custom_call.1}
  #allocation0 [shape = 'u32[]', space=smem, size = 0x4, offset = 0x4, fixed_abs, tag = 'smem constant byte address 0x4 - core index']
  #allocation1 [shape = 'u32[144,128]{1,0:T(1,128)}', space=vmem, size = 0x12000, scoped, tag = 'internal scratch']
  %s0 = inlined_call_operand.vmem [shape: f32[192,32], index: 0, kind: input, shape index: {}]
  %s1 = inlined_call_operand.vmem [shape: f32[1,32,256], index: 1, kind: input, shape index: {}]
  %s2 = inlined_call_operand.vmem [shape: f32[1,32,256], index: 2, kind: input, shape index: {}]
  %s3 = inlined_call_operand.hbm [shape: f32[1,192,256], index: 3, kind: output, shape index: {}]
  %s4 = sld [smem:[#allocation0]]
  $region22: #{tpu_custom_call.1} parent=0
    _
  %s6 = ssub.s32 1, %s4
  %s7 = scalar_select 0, %s6, %s4
  $region1: #{tpu_custom_call.1} parent=0
    #allocation2 [shape = 'u8[196608]{0}', space=vmem, size = 0x30000, scoped, tag = 'output window, operand 0, single buffered']
    #allocation3 [shape = 's32[1]{0}', space=sflag, size = 0x4, scoped, tag = 'scoped memory for tpu_custom_call.1']
    %8 = vsyncpa [#allocation3], 0
    // Predicated region
    $region2: #{tpu_custom_call.1} parent=1 // pred_check
      _
    $region3: #{tpu_custom_call.1} parent=1 // pred_check_branch
      %10 = sbr.rel (0) target = $region5
    $region4: #{tpu_custom_call.1} parent=1 // pred_region
      _
    $region5: #{tpu_custom_call.1} parent=1 // pred_fallthru
      _
    // Predicated region
    $region6: #{tpu_custom_call.1} parent=1 // pred_check
      _
    $region7: #{tpu_custom_call.1} parent=1 // pred_check_branch
      %12 = sbr.rel (0) target = $region9
    $region8: #{tpu_custom_call.1} parent=1 // pred_region
      _
    $region9: #{tpu_custom_call.1} parent=1 // pred_fallthru
      _
    // Predicated region
    $region10: #{tpu_custom_call.1} parent=1 // pred_check
      _
    $region11: #{tpu_custom_call.1} parent=1 // pred_check_branch
      %14 = sbr.rel (0) target = $region13
    $region12: #{tpu_custom_call.1} parent=1 // pred_region
      _
    $region13: #{tpu_custom_call.1} parent=1 // pred_fallthru
      _
    %v15 = vld [vmem:[%s1] sm:$0xff]
    %v16 = vld [vmem:[%s1 + $0x8] sm:$0xff]
    %v17 = vld [vmem:[%s1 + $0x10] sm:$0xff]
    %v18 = vld [vmem:[%s1 + $0x18] sm:$0xff]
    %v19 = vld [vmem:[%s1 + $0x20] sm:$0xff]
    %v20 = vld [vmem:[%s1 + $0x28] sm:$0xff]
    %v21 = vld [vmem:[%s1 + $0x30] sm:$0xff]
    %v22 = vld [vmem:[%s1 + $0x38] sm:$0xff]
    %v23 = vld [vmem:[%s2] sm:$0xff]
    %v24 = vld [vmem:[%s2 + $0x8] sm:$0xff]
    %v25 = vld [vmem:[%s2 + $0x10] sm:$0xff]
    %v26 = vld [vmem:[%s2 + $0x18] sm:$0xff]
    %v27 = vld [vmem:[%s2 + $0x20] sm:$0xff]
    %v28 = vld [vmem:[%s2 + $0x28] sm:$0xff]
    %v29 = vld [vmem:[%s2 + $0x30] sm:$0xff]
    %v30 = vld [vmem:[%s2 + $0x38] sm:$0xff]
    %v31 = vadd.f32 %v15, %v23
    %v32 = vadd.f32 %v16, %v24
    %v33 = vadd.f32 %v17, %v25
    %v34 = vadd.f32 %v18, %v26
    %v35 = vadd.f32 %v19, %v27
    %v36 = vadd.f32 %v20, %v28
    %v37 = vadd.f32 %v21, %v29
    %v38 = vadd.f32 %v22, %v30
    %v39 = vld [vmem:[%s0] sm:$0xff]
    %v40 = vld [vmem:[%s0 + $0x8] sm:$0xff]
    %v41 = vld [vmem:[%s0 + $0x10] sm:$0xff]
    %v42 = vld [vmem:[%s0 + $0x18] sm:$0xff]
    %v43 = vld [vmem:[%s0 + $0x20] sm:$0xff]
    %v44 = vld [vmem:[%s0 + $0x28] sm:$0xff]
    %v45 = vld [vmem:[%s0 + $0x30] sm:$0xff]
    %v46 = vld [vmem:[%s0 + $0x38] sm:$0xff]
    %v47 = vld [vmem:[%s0 + $0x40] sm:$0xff]
    %v48 = vld [vmem:[%s0 + $0x48] sm:$0xff]
    %v49 = vld [vmem:[%s0 + $0x50] sm:$0xff]
    %v50 = vld [vmem:[%s0 + $0x58] sm:$0xff]
    %v51 = vld [vmem:[%s0 + $0x60] sm:$0xff]
    %v52 = vld [vmem:[%s0 + $0x68] sm:$0xff]
    %v53 = vld [vmem:[%s0 + $0x70] sm:$0xff]
    %v54 = vld [vmem:[%s0 + $0x78] sm:$0xff]
    %v55 = vld [vmem:[%s0 + $0x80] sm:$0xff]
    %v56 = vld [vmem:[%s0 + $0x88] sm:$0xff]
    %v57 = vld [vmem:[%s0 + $0x90] sm:$0xff]
    %v58 = vld [vmem:[%s0 + $0x98] sm:$0xff]
    %v59 = vld [vmem:[%s0 + $0xa0] sm:$0xff]
    %v60 = vld [vmem:[%s0 + $0xa8] sm:$0xff]
    %v61 = vld [vmem:[%s0 + $0xb0] sm:$0xff]
    %v62 = vld [vmem:[%s0 + $0xb8] sm:$0xff]
    %vm63 = vcmask 261120
    %v65 = vsel %vm63, %v39, 0
    %v68 = vsel %vm63, %v40, 0
    %v71 = vsel %vm63, %v41, 0
    %v74 = vsel %vm63, %v42, 0
    %v77 = vsel %vm63, %v43, 0
    %v80 = vsel %vm63, %v44, 0
    %v83 = vsel %vm63, %v45, 0
    %v86 = vsel %vm63, %v46, 0
    %v89 = vsel %vm63, %v47, 0
    %v92 = vsel %vm63, %v48, 0
    %v95 = vsel %vm63, %v49, 0
    %v98 = vsel %vm63, %v50, 0
    %v101 = vsel %vm63, %v51, 0
    %v104 = vsel %vm63, %v52, 0
    %v107 = vsel %vm63, %v53, 0
    %v110 = vsel %vm63, %v54, 0
    %v113 = vsel %vm63, %v55, 0
    %v116 = vsel %vm63, %v56, 0
    %v119 = vsel %vm63, %v57, 0
    %v122 = vsel %vm63, %v58, 0
    %v125 = vsel %vm63, %v59, 0
    %v128 = vsel %vm63, %v60, 0
    %v131 = vsel %vm63, %v61, 0
    %v134 = vsel %vm63, %v62, 0
    %136 = vmatprep.subr.mxu0 %v32
    %137 = vmatpush1.msra.mxu0 %v31
    %138 = vmatprep.subr.mxu0 %v34
    %139 = vmatpush1.msra.mxu0 %v33
    %140 = vmatprep.subr.mxu0 %v36
    %141 = vmatpush1.msra.mxu0 %v35
    %142 = vmatprep.subr.mxu0 %v38
    %143 = vmatpush1.msra.mxu0 %v37
    %144 = vmatprep.subr.mxu0 0.0
    %145 = vmatpush1.msra.mxu0 0.0
    %146 = vmatprep.subr.mxu0 0.0
    %147 = vmatpush1.msra.mxu0 0.0
    %148 = vmatprep.subr.mxu0 0.0
    %149 = vmatpush1.msra.mxu0 0.0
    %150 = vmatprep.subr.mxu0 0.0
    %151 = vmatpush1.msra.mxu0 0.0
    %152 = vmatprep.subr.mxu0 0.0
    %153 = vmatpush1.msra.mxu0 0.0
    %154 = vmatprep.subr.mxu0 0.0
    %155 = vmatpush1.msra.mxu0 0.0
    %156 = vmatprep.subr.mxu0 0.0
    %157 = vmatpush1.msra.mxu0 0.0
    %158 = vmatprep.subr.mxu0 0.0
    %159 = vmatpush1.msra.mxu0 0.0
    %160 = vmatprep.subr.mxu0 0.0
    %161 = vmatpush1.msra.mxu0 0.0
    %162 = vmatprep.subr.mxu0 0.0
    %163 = vmatpush1.msra.mxu0 0.0
    %164 = vmatprep.subr.mxu0 0.0
    %165 = vmatpush1.msra.mxu0 0.0
    %166 = vmatprep.subr.mxu0 0.0
    %167 = vmatpush1.msra.mxu0 0.0
    %168 = vmatprep.subr.mxu0 0.0
    %169 = vmatpush1.msra.mxu0 0.0
    %170 = vmatprep.subr.mxu0 0.0
    %171 = vmatpush1.msra.mxu0 0.0
    %172 = vmatprep.subr.mxu0 0.0
    %173 = vmatpush1.msra.mxu0 0.0
    %174 = vmatprep.subr.mxu0 0.0
    %175 = vmatpush1.msra.mxu0 0.0
    %176 = vmatprep.subr.mxu0 0.0
    %177 = vmatpush1.msra.mxu0 0.0
    %178 = vmatprep.subr.mxu0 0.0
    %179 = vmatpush1.msra.mxu0 0.0
    %180 = vmatprep.subr.mxu0 0.0
    %181 = vmatpush1.msra.mxu0 0.0
    %182 = vmatprep.subr.mxu0 0.0
    %183 = vmatpush1.msra.mxu0 0.0
    %184 = vmatprep.subr.mxu0 0.0
    %185 = vmatpush1.msra.mxu0 0.0
    %186 = vmatprep.subr.mxu0 0.0
    %187 = vmatpush1.msra.mxu0 0.0
    %188 = vmatprep.subr.mxu0 0.0
    %189 = vmatpush1.msra.mxu0 0.0
    %190 = vmatprep.subr.mxu0 0.0
    %191 = vmatpush1.msra.mxu0 0.0
    %192 = vmatprep.subr.mxu0 0.0
    %193 = vmatpush1.msra.mxu0 0.0
    %194 = vmatprep.subr.mxu0 0.0
    %195 = vmatpush1.msra.mxu0 0.0
    %196 = vmatprep.subr.mxu0 0.0
    %197 = vmatpush1.msra.mxu0 0.0
    %198 = vmatprep.subr.mxu0 0.0
    %199 = vmatpush1.msra.mxu0 0.0
    %200 = vmatprep.mubr.f32.mxu0 0.0
    %201 = vmatmul.mubr.f32.gmra.mrb[0].mxu0 %v65
    %v202 = vpop.f32.mrb[0].mxu0
    %v203 = vadd.f32 0.0, %v202
    %v204 = vpop.f32.mrb[0].mxu0
    %v205 = vadd.f32 0.0, %v204
    %206 = vmatprep.mubr.f32.mxu0 0.0
    %207 = vmatmul.mubr.f32.gmra.mrb[0].mxu0 %v68
    %v208 = vpop.f32.mrb[0].mxu0
    %v209 = vadd.f32 0.0, %v208
    %v210 = vpop.f32.mrb[0].mxu0
    %v211 = vadd.f32 0.0, %v210
    %212 = vmatprep.mubr.f32.mxu0 0.0
    %213 = vmatmul.mubr.f32.gmra.mrb[0].mxu0 %v71
    %v214 = vpop.f32.mrb[0].mxu0
    %v215 = vadd.f32 0.0, %v214
    %v216 = vpop.f32.mrb[0].mxu0
    %v217 = vadd.f32 0.0, %v216
    %218 = vmatprep.mubr.f32.mxu0 0.0
    %219 = vmatmul.mubr.f32.gmra.mrb[0].mxu0 %v74
    %v220 = vpop.f32.mrb[0].mxu0
    %v221 = vadd.f32 0.0, %v220
    %v222 = vpop.f32.mrb[0].mxu0
    %v223 = vadd.f32 0.0, %v222
    %224 = vmatprep.mubr.f32.mxu0 0.0
    %225 = vmatmul.mubr.f32.gmra.mrb[0].mxu0 %v77
    %v226 = vpop.f32.mrb[0].mxu0
    %v227 = vadd.f32 0.0, %v226
    %v228 = vpop.f32.mrb[0].mxu0
    %v229 = vadd.f32 0.0, %v228
    %230 = vmatprep.mubr.f32.mxu0 0.0
    %231 = vmatmul.mubr.f32.gmra.mrb[0].mxu0 %v80
    %v232 = vpop.f32.mrb[0].mxu0
    %v233 = vadd.f32 0.0, %v232
    %v234 = vpop.f32.mrb[0].mxu0
    %v235 = vadd.f32 0.0, %v234
    %236 = vmatprep.mubr.f32.mxu0 0.0
    %237 = vmatmul.mubr.f32.gmra.mrb[0].mxu0 %v83
    %v238 = vpop.f32.mrb[0].mxu0
    %v239 = vadd.f32 0.0, %v238
    %v240 = vpop.f32.mrb[0].mxu0
    %v241 = vadd.f32 0.0, %v240
    %242 = vmatprep.mubr.f32.mxu0 0.0
    %243 = vmatmul.mubr.f32.gmra.mrb[0].mxu0 %v86
    %v244 = vpop.f32.mrb[0].mxu0
    %v245 = vadd.f32 0.0, %v244
    %v246 = vpop.f32.mrb[0].mxu0
    %v247 = vadd.f32 0.0, %v246
    %248 = vmatprep.mubr.f32.mxu0 0.0
    %249 = vmatmul.mubr.f32.gmra.mrb[0].mxu0 %v89
    %v250 = vpop.f32.mrb[0].mxu0
    %v251 = vadd.f32 0.0, %v250
    %v252 = vpop.f32.mrb[0].mxu0
    %v253 = vadd.f32 0.0, %v252
    %254 = vmatprep.mubr.f32.mxu0 0.0
    %255 = vmatmul.mubr.f32.gmra.mrb[0].mxu0 %v92
    %v256 = vpop.f32.mrb[0].mxu0
    %v257 = vadd.f32 0.0, %v256
    %v258 = vpop.f32.mrb[0].mxu0
    %v259 = vadd.f32 0.0, %v258
    %260 = vmatprep.mubr.f32.mxu0 0.0
    %261 = vmatmul.mubr.f32.gmra.mrb[0].mxu0 %v95
    %v262 = vpop.f32.mrb[0].mxu0
    %v263 = vadd.f32 0.0, %v262
    %v264 = vpop.f32.mrb[0].mxu0
    %v265 = vadd.f32 0.0, %v264
    %266 = vmatprep.mubr.f32.mxu0 0.0
    %267 = vmatmul.mubr.f32.gmra.mrb[0].mxu0 %v98
    %v268 = vpop.f32.mrb[0].mxu0
    %v269 = vadd.f32 0.0, %v268
    %v270 = vpop.f32.mrb[0].mxu0
    %v271 = vadd.f32 0.0, %v270
    %272 = vmatprep.mubr.f32.mxu0 0.0
    %273 = vmatmul.mubr.f32.gmra.mrb[0].mxu0 %v101
    %v274 = vpop.f32.mrb[0].mxu0
    %v275 = vadd.f32 0.0, %v274
    %v276 = vpop.f32.mrb[0].mxu0
    %v277 = vadd.f32 0.0, %v276
    %278 = vmatprep.mubr.f32.mxu0 0.0
    %279 = vmatmul.mubr.f32.gmra.mrb[0].mxu0 %v104
    %v280 = vpop.f32.mrb[0].mxu0
    %v281 = vadd.f32 0.0, %v280
    %v282 = vpop.f32.mrb[0].mxu0
    %v283 = vadd.f32 0.0, %v282
    %284 = vmatprep.mubr.f32.mxu0 0.0
    %285 = vmatmul.mubr.f32.gmra.mrb[0].mxu0 %v107
    %v286 = vpop.f32.mrb[0].mxu0
    %v287 = vadd.f32 0.0, %v286
    %v288 = vpop.f32.mrb[0].mxu0
    %v289 = vadd.f32 0.0, %v288
    %290 = vmatprep.mubr.f32.mxu0 0.0
    %291 = vmatmul.mubr.f32.gmra.mrb[0].mxu0 %v110
    %v292 = vpop.f32.mrb[0].mxu0
    %v293 = vadd.f32 0.0, %v292
    %v294 = vpop.f32.mrb[0].mxu0
    %v295 = vadd.f32 0.0, %v294
    %296 = vmatprep.mubr.f32.mxu0 0.0
    %297 = vmatmul.mubr.f32.gmra.mrb[0].mxu0 %v113
    %v298 = vpop.f32.mrb[0].mxu0
    %v299 = vadd.f32 0.0, %v298
    %v300 = vpop.f32.mrb[0].mxu0
    %v301 = vadd.f32 0.0, %v300
    %302 = vmatprep.mubr.f32.mxu0 0.0
    %303 = vmatmul.mubr.f32.gmra.mrb[0].mxu0 %v116
    %v304 = vpop.f32.mrb[0].mxu0
    %v305 = vadd.f32 0.0, %v304
    %v306 = vpop.f32.mrb[0].mxu0
    %v307 = vadd.f32 0.0, %v306
    %308 = vmatprep.mubr.f32.mxu0 0.0
    %309 = vmatmul.mubr.f32.gmra.mrb[0].mxu0 %v119
    %v310 = vpop.f32.mrb[0].mxu0
    %v311 = vadd.f32 0.0, %v310
    %v312 = vpop.f32.mrb[0].mxu0
    %v313 = vadd.f32 0.0, %v312
    %314 = vmatprep.mubr.f32.mxu0 0.0
    %315 = vmatmul.mubr.f32.gmra.mrb[0].mxu0 %v122
    %v316 = vpop.f32.mrb[0].mxu0
    %v317 = vadd.f32 0.0, %v316
    %v318 = vpop.f32.mrb[0].mxu0
    %v319 = vadd.f32 0.0, %v318
    %320 = vmatprep.mubr.f32.mxu0 0.0
    %321 = vmatmul.mubr.f32.gmra.mrb[0].mxu0 %v125
    %v322 = vpop.f32.mrb[0].mxu0
    %v323 = vadd.f32 0.0, %v322
    %v324 = vpop.f32.mrb[0].mxu0
    %v325 = vadd.f32 0.0, %v324
    %326 = vmatprep.mubr.f32.mxu0 0.0
    %327 = vmatmul.mubr.f32.gmra.mrb[0].mxu0 %v128
    %v328 = vpop.f32.mrb[0].mxu0
    %v329 = vadd.f32 0.0, %v328
    %v330 = vpop.f32.mrb[0].mxu0
    %v331 = vadd.f32 0.0, %v330
    %332 = vmatprep.mubr.f32.mxu0 0.0
    %333 = vmatmul.mubr.f32.gmra.mrb[0].mxu0 %v131
    %v334 = vpop.f32.mrb[0].mxu0
    %v335 = vadd.f32 0.0, %v334
    %v336 = vpop.f32.mrb[0].mxu0
    %v337 = vadd.f32 0.0, %v336
    %338 = vmatprep.mubr.f32.mxu0 0.0
    %339 = vmatmul.mubr.f32.gmra.mrb[0].mxu0 %v134
    %v340 = vpop.f32.mrb[0].mxu0
    %v341 = vadd.f32 0.0, %v340
    %v342 = vpop.f32.mrb[0].mxu0
    %v343 = vadd.f32 0.0, %v342
    %344 = vdwg.mxu0
    %345 = vst [vmem:[#allocation2] sm:$0xff] %v203
    %346 = vst [vmem:[#allocation2 + $0x8] sm:$0xff] %v205
    %347 = vst [vmem:[#allocation2 + $0x10] sm:$0xff] %v209
    %348 = vst [vmem:[#allocation2 + $0x18] sm:$0xff] %v211
    %349 = vst [vmem:[#allocation2 + $0x20] sm:$0xff] %v215
    %350 = vst [vmem:[#allocation2 + $0x28] sm:$0xff] %v217
    %351 = vst [vmem:[#allocation2 + $0x30] sm:$0xff] %v221
    %352 = vst [vmem:[#allocation2 + $0x38] sm:$0xff] %v223
    %353 = vst [vmem:[#allocation2 + $0x40] sm:$0xff] %v227
    %354 = vst [vmem:[#allocation2 + $0x48] sm:$0xff] %v229
    %355 = vst [vmem:[#allocation2 + $0x50] sm:$0xff] %v233
    %356 = vst [vmem:[#allocation2 + $0x58] sm:$0xff] %v235
    %357 = vst [vmem:[#allocation2 + $0x60] sm:$0xff] %v239
    %358 = vst [vmem:[#allocation2 + $0x68] sm:$0xff] %v241
    %359 = vst [vmem:[#allocation2 + $0x70] sm:$0xff] %v245
    %360 = vst [vmem:[#allocation2 + $0x78] sm:$0xff] %v247
    %361 = vst [vmem:[#allocation2 + $0x80] sm:$0xff] %v251
    %362 = vst [vmem:[#allocation2 + $0x88] sm:$0xff] %v253
    %363 = vst [vmem:[#allocation2 + $0x90] sm:$0xff] %v257
    %364 = vst [vmem:[#allocation2 + $0x98] sm:$0xff] %v259
    %365 = vst [vmem:[#allocation2 + $0xa0] sm:$0xff] %v263
    %366 = vst [vmem:[#allocation2 + $0xa8] sm:$0xff] %v265
    %367 = vst [vmem:[#allocation2 + $0xb0] sm:$0xff] %v269
    %368 = vst [vmem:[#allocation2 + $0xb8] sm:$0xff] %v271
    %369 = vst [vmem:[#allocation2 + $0xc0] sm:$0xff] %v275
    %370 = vst [vmem:[#allocation2 + $0xc8] sm:$0xff] %v277
    %371 = vst [vmem:[#allocation2 + $0xd0] sm:$0xff] %v281
    %372 = vst [vmem:[#allocation2 + $0xd8] sm:$0xff] %v283
    %373 = vst [vmem:[#allocation2 + $0xe0] sm:$0xff] %v287
    %374 = vst [vmem:[#allocation2 + $0xe8] sm:$0xff] %v289
    %375 = vst [vmem:[#allocation2 + $0xf0] sm:$0xff] %v293
    %376 = vst [vmem:[#allocation2 + $0xf8] sm:$0xff] %v295
    %377 = vst [vmem:[#allocation2 + $0x100] sm:$0xff] %v299
    %378 = vst [vmem:[#allocation2 + $0x108] sm:$0xff] %v301
    %379 = vst [vmem:[#allocation2 + $0x110] sm:$0xff] %v305
    %380 = vst [vmem:[#allocation2 + $0x118] sm:$0xff] %v307
    %381 = vst [vmem:[#allocation2 + $0x120] sm:$0xff] %v311
    %382 = vst [vmem:[#allocation2 + $0x128] sm:$0xff] %v313
    %383 = vst [vmem:[#allocation2 + $0x130] sm:$0xff] %v317
    %384 = vst [vmem:[#allocation2 + $0x138] sm:$0xff] %v319
    %385 = vst [vmem:[#allocation2 + $0x140] sm:$0xff] %v323
    %386 = vst [vmem:[#allocation2 + $0x148] sm:$0xff] %v325
    %387 = vst [vmem:[#allocation2 + $0x150] sm:$0xff] %v329
    %388 = vst [vmem:[#allocation2 + $0x158] sm:$0xff] %v331
    %389 = vst [vmem:[#allocation2 + $0x160] sm:$0xff] %v335
    %390 = vst [vmem:[#allocation2 + $0x168] sm:$0xff] %v337
    %391 = vst [vmem:[#allocation2 + $0x170] sm:$0xff] %v341
    %392 = vst [vmem:[#allocation2 + $0x178] sm:$0xff] %v343
    // Predicated region
    $region14: #{tpu_custom_call.1} parent=1 // pred_check
      _
    $region15: #{tpu_custom_call.1} parent=1 // pred_check_branch
      %394 = sbr.rel (0) target = $region17
    $region16: #{tpu_custom_call.1} parent=1 // pred_region
      %s396 = ssub.s32 6144, 6144
      %397 = vsyncadd [#allocation3], %s396
      %s398 = sshll.u32 [#allocation2], 4
      %s399 = int_to_ptr.vmem [resolvable:$true] %s398
      %404 = dma.vmem_to_hbm [thread:$0]  %s399, 6144, %s3, [#allocation3], 256, 256, 16
    $region17: #{tpu_custom_call.1} parent=1 // pred_fallthru
      _
    // Predicated region
    $region18: #{tpu_custom_call.1} parent=1 // pred_check
      _
    $region19: #{tpu_custom_call.1} parent=1 // pred_check_branch
      %406 = sbr.rel (0) target = $region21
    $region20: #{tpu_custom_call.1} parent=1 // pred_region
      %407 = dma.done [#allocation3], 6144
    $region21: #{tpu_custom_call.1} parent=1 // pred_fallthru
      _
    %408 = vsyncpa [#allocation3], 1

</llo_original>
